<compile_context>
chip_gen: v6e
topology: v6e:2x2x1
jax: 0.10.0
libtpu: 0.0.40
codegen_flags: <defaults>
</compile_context>

<pallas_src>
import jax
import jax.numpy as jnp
from jax.experimental import pallas as pl
from jax.experimental.pallas import tpu as pltpu


def _make_mean_kernel(n_total: int, unroll_threshold: int = 32):
    """Kernel: accumulate sum over the points axis, emit mean at the last step."""
    inv_n = 1.0 / float(n_total)

    def kernel(x_ref, o_ref, acc_ref):
        # x_ref:   (T, Nt, D) input tile (T flattened (batch, part) rows)
        # o_ref:   (T, D)     lane/sublane-dense output tile
        # acc_ref: (T, D)     f32 accumulator, persistent across the N axis
        k = pl.program_id(1)  # reduction (points) axis, innermost

        @pl.when(k == 0)
        def _init():
            acc_ref[...] = jnp.zeros_like(acc_ref)

        nt = x_ref.shape[1]
        if nt <= unroll_threshold:
            # Slice-accumulate: pure VALU adds + dense stores; avoids the XLU
            # cross-sublane reduce and never materializes a (T, Nt, D) value.
            acc = acc_ref[...]
            for n in range(nt):
                acc = acc + x_ref[:, n, :].astype(jnp.float32)
            acc_ref[...] = acc
        else:
            acc_ref[...] += jnp.sum(x_ref[...].astype(jnp.float32), axis=1)

        @pl.when(k == pl.num_programs(1) - 1)
        def _finalize():
            o_ref[...] = (acc_ref[...] * inv_n).astype(o_ref.dtype)

    return kernel


def _choose_tiling(BP, N, D, itemsize, *, target_in_bytes=4 << 20):
    """Pick (T rows, Nt points) per block from a VMEM byte budget."""
    # ---- Nt: tile of the points axis ------------------------------------
    # Only divisors of N are used (no masking needed for ragged point tiles);
    # candidates are multiples of 8 so the input block stays sublane-aligned.
    if 8 * N * D * itemsize <= target_in_bytes:
        nt = N
    else:
        divisors = [d for d in range(8, N, 8) if N % d == 0]
        fitting = [d for d in divisors if 8 * d * D * itemsize <= target_in_bytes]
        if fitting:
            nt = max(fitting)
        elif divisors:
            nt = min(divisors)
        else:
            nt = N  # no clean sublane-aligned divisor; take the whole axis

    # ---- T: rows per block, byte-budgeted --------------------------------
    t = max(1, target_in_bytes // (nt * D * itemsize))
    t = min(t, BP)
    # Guarantee >= 2 steps on the parallel (row) axis when possible so v7x's
    # two TensorCores both get work (harmless on single-TC v5e/v6e).
    if BP >= 16:
        t = min(t, -(-BP // 2))  # ceil(BP / 2)
    if BP >= 8:
        t = max(8, (t // 8) * 8)  # multiple of 8: unmasked output stores
    else:
        t = BP  # block equals full array dim -> allowed despite <8
    return t, nt


def weighted_aggregation(x, w=None, b=None, *, target_block_bytes=4 << 20):
    """x: (B, P, N, D) -> (B, P, D).

    w: (1, D), b: (1,) are accepted for API parity with the PyTorch module but
    provably do not affect the result (softmax over a size-1 axis is 1).
    """
    del w, b  # mathematically irrelevant to the forward pass (see header)

    B, P, N, D = x.shape
    BP = B * P
    xf = x.reshape(BP, N, D)
    itemsize = jnp.dtype(x.dtype).itemsize

    T, Nt = _choose_tiling(BP, N, D, itemsize, target_in_bytes=target_block_bytes)

    # Explicit scoped-VMEM budget: double-buffered input + double-buffered
    # output + f32 accumulator, with headroom.  Stays well under v5e's 16 MiB
    # scoped default and v7x's 64 MiB physical for the budgeted tile sizes.
    working_set = 2 * T * Nt * D * itemsize + 2 * T * D * itemsize + T * D * 4
    vmem_limit = max(int(working_set * 3 // 2), 16 << 20)

    kernel = _make_mean_kernel(N)

    out = pl.pallas_call(
        kernel,
        out_shape=jax.ShapeDtypeStruct((BP, D), x.dtype),
        grid=(pl.cdiv(BP, T), pl.cdiv(N, Nt)),  # reduction axis last
        in_specs=[
            pl.BlockSpec((T, Nt, D), lambda i, k: (i, k, 0)),
        ],
        out_specs=pl.BlockSpec((T, D), lambda i, k: (i, 0)),  # constant over k
        scratch_shapes=[pltpu.VMEM((T, D), jnp.float32)],
        compiler_params=pltpu.CompilerParams(
            dimension_semantics=("parallel", "arbitrary"),
            vmem_limit_bytes=vmem_limit,
        ),
        cost_estimate=pl.CostEstimate(
            flops=BP * N * D,
            bytes_accessed=BP * N * D * itemsize + BP * D * itemsize,
            transcendentals=0,
        ),
    )(xf)

    return out.reshape(B, P, D)


if __name__ == "__main__":
    # Small shapes consistent with the module: batch=2, parts=4, points=8,
    # feature_dim=128 (nn.Linear(feature_dim=128, 1)).
    B, P, N, D = 2, 4, 8, 128

    key = jax.random.PRNGKey(0)
    kx, kw, kb = jax.random.split(key, 3)

    x = jax.random.normal(kx, (B, P, N, D), dtype=jnp.float32)
    # nn.Linear(feature_dim, 1) parameters — carried for fidelity; no effect on output.
    w = jax.random.normal(kw, (1, D), dtype=jnp.float32) * 0.05
    b = jax.random.normal(kb, (1,), dtype=jnp.float32) * 0.05

    out = weighted_aggregation(x, w, b)
    out = jax.block_until_ready(out)

    # Pure-JAX reference with the *full* original semantics (Linear + softmax
    # over dim=-1 + mean over dim=2) to prove the simplification is exact.
    logits = jnp.einsum("bpnd,od->bpno", x, w) + b          # (B, P, N, 1)
    weights = jax.nn.softmax(logits, axis=-1)               # size-1 softmax -> ones
    ref = jnp.mean(weights * x, axis=2)                     # (B, P, D)

    assert out.shape == (B, P, D)
    assert jnp.allclose(out, ref, atol=1e-5, rtol=1e-5), "mismatch vs reference"
    print("KERNEL_OK")
</pallas_src>

<mosaic_0001>
module attributes {stable_mosaic.version = 11 : i64} {
  func.func @kernel(%arg0: i32, %arg1: i32, %arg2: memref<8x8x128xf32, #tpu.memory_space<vmem>>, %arg3: memref<8x128xf32, #tpu.memory_space<vmem>>, %arg4: memref<8x128xf32, #tpu.memory_space<vmem>>) attributes {dimension_semantics = [#tpu.dimension_semantics<parallel>, #tpu.dimension_semantics<arbitrary>], iteration_bounds = array<i64: 1, 1>, scalar_prefetch = 0 : i64, scratch_operands = 1 : i64, tpu.core_type = #tpu.core_type<tc>, window_params = [{transform_indices = @transform_0, window_bounds = array<i64: 8, 8, 128>}, {transform_indices = @transform_1, window_bounds = array<i64: 8, 128>}]} {
    %c0_i32 = arith.constant 0 : i32
    %0 = arith.cmpi eq, %arg1, %c0_i32 : i32
    %1 = arith.extui %0 : i1 to i32
    %c0_i32_0 = arith.constant 0 : i32
    %2 = arith.cmpi ne, %1, %c0_i32_0 : i32
    scf.if %2 {
      %cst = arith.constant 0.000000e+00 : f32
      %32 = vector.broadcast %cst : f32 to vector<8x128xf32>
      %c0_23 = arith.constant 0 : index
      %c0_24 = arith.constant 0 : index
      %33 = vector.load %arg4[%c0_23, %c0_24] : memref<8x128xf32, #tpu.memory_space<vmem>>, vector<8x128xf32>
      tpu.vector_store %arg4[%c0_23, %c0_24], %32 {strides = array<i32>} : memref<8x128xf32, #tpu.memory_space<vmem>>, vector<8x128xf32>,
    } else {
    }
    %c0 = arith.constant 0 : index
    %c0_1 = arith.constant 0 : index
    %3 = vector.load %arg4[%c0, %c0_1] : memref<8x128xf32, #tpu.memory_space<vmem>>, vector<8x128xf32>
    %c0_2 = arith.constant 0 : index
    %c0_3 = arith.constant 0 : index
    %c0_4 = arith.constant 0 : index
    %4 = vector.load %arg2[%c0_2, %c0_3, %c0_4] : memref<8x8x128xf32, #tpu.memory_space<vmem>>, vector<8x1x128xf32>
    %5 = vector.shape_cast %4 : vector<8x1x128xf32> to vector<8x128xf32>
    %6 = arith.addf %3, %5 : vector<8x128xf32>
    %c0_5 = arith.constant 0 : index
    %c1 = arith.constant 1 : index
    %c0_6 = arith.constant 0 : index
    %7 = vector.load %arg2[%c0_5, %c1, %c0_6] : memref<8x8x128xf32, #tpu.memory_space<vmem>>, vector<8x1x128xf32>
    %8 = vector.shape_cast %7 : vector<8x1x128xf32> to vector<8x128xf32>
    %9 = arith.addf %6, %8 : vector<8x128xf32>
    %c0_7 = arith.constant 0 : index
    %c2 = arith.constant 2 : index
    %c0_8 = arith.constant 0 : index
    %10 = vector.load %arg2[%c0_7, %c2, %c0_8] : memref<8x8x128xf32, #tpu.memory_space<vmem>>, vector<8x1x128xf32>
    %11 = vector.shape_cast %10 : vector<8x1x128xf32> to vector<8x128xf32>
    %12 = arith.addf %9, %11 : vector<8x128xf32>
    %c0_9 = arith.constant 0 : index
    %c3 = arith.constant 3 : index
    %c0_10 = arith.constant 0 : index
    %13 = vector.load %arg2[%c0_9, %c3, %c0_10] : memref<8x8x128xf32, #tpu.memory_space<vmem>>, vector<8x1x128xf32>
    %14 = vector.shape_cast %13 : vector<8x1x128xf32> to vector<8x128xf32>
    %15 = arith.addf %12, %14 : vector<8x128xf32>
    %c0_11 = arith.constant 0 : index
    %c4 = arith.constant 4 : index
    %c0_12 = arith.constant 0 : index
    %16 = vector.load %arg2[%c0_11, %c4, %c0_12] : memref<8x8x128xf32, #tpu.memory_space<vmem>>, vector<8x1x128xf32>
    %17 = vector.shape_cast %16 : vector<8x1x128xf32> to vector<8x128xf32>
    %18 = arith.addf %15, %17 : vector<8x128xf32>
    %c0_13 = arith.constant 0 : index
    %c5 = arith.constant 5 : index
    %c0_14 = arith.constant 0 : index
    %19 = vector.load %arg2[%c0_13, %c5, %c0_14] : memref<8x8x128xf32, #tpu.memory_space<vmem>>, vector<8x1x128xf32>
    %20 = vector.shape_cast %19 : vector<8x1x128xf32> to vector<8x128xf32>
    %21 = arith.addf %18, %20 : vector<8x128xf32>
    %c0_15 = arith.constant 0 : index
    %c6 = arith.constant 6 : index
    %c0_16 = arith.constant 0 : index
    %22 = vector.load %arg2[%c0_15, %c6, %c0_16] : memref<8x8x128xf32, #tpu.memory_space<vmem>>, vector<8x1x128xf32>
    %23 = vector.shape_cast %22 : vector<8x1x128xf32> to vector<8x128xf32>
    %24 = arith.addf %21, %23 : vector<8x128xf32>
    %c0_17 = arith.constant 0 : index
    %c7 = arith.constant 7 : index
    %c0_18 = arith.constant 0 : index
    %25 = vector.load %arg2[%c0_17, %c7, %c0_18] : memref<8x8x128xf32, #tpu.memory_space<vmem>>, vector<8x1x128xf32>
    %26 = vector.shape_cast %25 : vector<8x1x128xf32> to vector<8x128xf32>
    %27 = arith.addf %24, %26 : vector<8x128xf32>
    %c0_19 = arith.constant 0 : index
    %c0_20 = arith.constant 0 : index
    %28 = vector.load %arg4[%c0_19, %c0_20] : memref<8x128xf32, #tpu.memory_space<vmem>>, vector<8x128xf32>
    tpu.vector_store %arg4[%c0_19, %c0_20], %27 {strides = array<i32>} : memref<8x128xf32, #tpu.memory_space<vmem>>, vector<8x128xf32>,
    %c0_i32_21 = arith.constant 0 : i32
    %29 = arith.cmpi eq, %arg1, %c0_i32_21 : i32
    %30 = arith.extui %29 : i1 to i32
    %c0_i32_22 = arith.constant 0 : i32
    %31 = arith.cmpi ne, %30, %c0_i32_22 : i32
    scf.if %31 {
      %c0_23 = arith.constant 0 : index
      %c0_24 = arith.constant 0 : index
      %32 = vector.load %arg4[%c0_23, %c0_24] : memref<8x128xf32, #tpu.memory_space<vmem>>, vector<8x128xf32>
      %cst = arith.constant 1.250000e-01 : f32
      %33 = vector.broadcast %cst : f32 to vector<8x128xf32>
      %34 = arith.mulf %32, %33 : vector<8x128xf32>
      %c0_25 = arith.constant 0 : index
      %c0_26 = arith.constant 0 : index
      %35 = vector.load %arg3[%c0_25, %c0_26] : memref<8x128xf32, #tpu.memory_space<vmem>>, vector<8x128xf32>
      tpu.vector_store %arg3[%c0_25, %c0_26], %34 {strides = array<i32>} : memref<8x128xf32, #tpu.memory_space<vmem>>, vector<8x128xf32>,
    } else {
    }
    return
  }
  func.func @transform_0(%arg0: i32, %arg1: i32) -> (i32, i32, i32) {
    %c0_i32 = arith.constant 0 : i32
    %c0_i32_0 = arith.constant 0 : i32
    return %arg0, %arg1, %c0_i32 : i32, i32, i32
  }
  func.func @transform_1(%arg0: i32, %arg1: i32) -> (i32, i32) {
    %c0_i32 = arith.constant 0 : i32
    %c0_i32_0 = arith.constant 0 : i32
    return %arg0, %c0_i32 : i32, i32
  }
}

</mosaic_0001>

<llo_original>
// kernel: tpu_custom_call.1
$region0: #{tpu_custom_call.1}
  #allocation0 [shape = 'u32[]', space=smem, size = 0x4, offset = 0x4, fixed_abs, tag = 'smem constant byte address 0x4 - core index']
  #allocation1 [shape = 'u32[144,128]{1,0:T(1,128)}', space=vmem, size = 0x12000, scoped, tag = 'internal scratch']
  #allocation2 [shape = 'f32[8,128]{1,0:T(8,128)}', space=vmem, size = 0x1000, scoped, tag = 'scratch operand']
  %s0 = inlined_call_operand.hbm [shape: f32[8,8,128], index: 0, kind: input, shape index: {}]
  %s1 = inlined_call_operand.hbm [shape: f32[8,128], index: 1, kind: output, shape index: {}]
  %s2 = sld [smem:[#allocation0]]
  $region26: #{tpu_custom_call.1} parent=0
    _
  %s4 = ssub.s32 1, %s2
  %s5 = scalar_select 0, %s4, %s2
  $region1: #{tpu_custom_call.1} parent=0
    #allocation3 [shape = 'u8[32768]{0}', space=vmem, size = 0x8000, scoped, tag = 'input window, operand 0, single buffered']
    #allocation4 [shape = 's32[1]{0}', space=sflag, size = 0x4, scoped, tag = 'scoped memory for tpu_custom_call.1']
    #allocation5 [shape = 's32[1]{0}', space=sflag, size = 0x4, scoped, tag = 'scoped memory for tpu_custom_call.1']
    #allocation6 [shape = 'u8[4096]{0}', space=vmem, size = 0x1000, scoped, tag = 'output window, operand 0, single buffered']
    %6 = vsyncpa [#allocation4], 0
    %7 = vsyncpa [#allocation5], 0
    // Predicated region
    $region2: #{tpu_custom_call.1} parent=1 // pred_check
      _
    $region3: #{tpu_custom_call.1} parent=1 // pred_check_branch
      %9 = sbr.rel (0) target = $region5
    $region4: #{tpu_custom_call.1} parent=1 // pred_region
      %s11 = ssub.s32 1024, 1024
      %12 = vsyncadd [#allocation4], %s11
      %s13 = sshll.u32 [#allocation3], 4
      %s14 = int_to_ptr.vmem [resolvable:$true] %s13
      %19 = dma.hbm_to_vmem [thread:$0]  %s0, 1024, %s14, [#allocation4], 128, 128, 8
    $region5: #{tpu_custom_call.1} parent=1 // pred_fallthru
      _
    // Predicated region
    $region6: #{tpu_custom_call.1} parent=1 // pred_check
      _
    $region7: #{tpu_custom_call.1} parent=1 // pred_check_branch
      %21 = sbr.rel (0) target = $region9
    $region8: #{tpu_custom_call.1} parent=1 // pred_region
      %22 = dma.done [#allocation4], 1024
    $region9: #{tpu_custom_call.1} parent=1 // pred_fallthru
      _
    %p23 = scmp.eq.s32.totalorder 0, 0
    // Predicated region
    $region10: #{tpu_custom_call.1} parent=1 // pred_check
      %p24 = pneg %p23
    $region11: #{tpu_custom_call.1} parent=1 // pred_check_branch
      %26 = sbr.rel (%p24) target = $region13
    $region12: #{tpu_custom_call.1} parent=1 // pred_region
      %27 = vst [vmem:[#allocation2] sm:$0xff] 0.0
    $region13: #{tpu_custom_call.1} parent=1 // pred_fallthru
      _
    %v28 = vld [vmem:[#allocation2] sm:$0xff]
    %v29 = vld [vmem:[#allocation3] sm:$0x1]
    %v30 = vld [vmem:[#allocation3 + $0x8] sm:$0x1]
    %v31 = vld [vmem:[#allocation3 + $0x10] sm:$0x1]
    %v32 = vld [vmem:[#allocation3 + $0x18] sm:$0x1]
    %v33 = vld [vmem:[#allocation3 + $0x20] sm:$0x1]
    %v34 = vld [vmem:[#allocation3 + $0x28] sm:$0x1]
    %v35 = vld [vmem:[#allocation3 + $0x30] sm:$0x1]
    %v36 = vld [vmem:[#allocation3 + $0x38] sm:$0x1]
    %v45 = vrot.slane %v30, 7
    %vm46 = vcmask 1041409
    %v47 = vsel %vm46, %v45, %v29
    %v48 = vrot.slane %v31, 6
    %vm49 = vcmask 1042434
    %v50 = vsel %vm49, %v48, %v47
    %v51 = vrot.slane %v32, 5
    %vm52 = vcmask 1043459
    %v53 = vsel %vm52, %v51, %v50
    %v54 = vrot.slane %v33, 4
    %vm55 = vcmask 1044484
    %v56 = vsel %vm55, %v54, %v53
    %v57 = vrot.slane %v34, 3
    %vm58 = vcmask 1045509
    %v59 = vsel %vm58, %v57, %v56
    %v60 = vrot.slane %v35, 2
    %vm61 = vcmask 1046534
    %v62 = vsel %vm61, %v60, %v59
    %v63 = vrot.slane %v36, 1
    %vm64 = vcmask 1047559
    %v65 = vsel %vm64, %v63, %v62
    %v67 = vadd.f32 %v28, %v65
    %v68 = vld [vmem:[#allocation3 + $0x1] sm:$0x1]
    %v69 = vld [vmem:[#allocation3 + $0x9] sm:$0x1]
    %v70 = vld [vmem:[#allocation3 + $0x11] sm:$0x1]
    %v71 = vld [vmem:[#allocation3 + $0x19] sm:$0x1]
    %v72 = vld [vmem:[#allocation3 + $0x21] sm:$0x1]
    %v73 = vld [vmem:[#allocation3 + $0x29] sm:$0x1]
    %v74 = vld [vmem:[#allocation3 + $0x31] sm:$0x1]
    %v75 = vld [vmem:[#allocation3 + $0x39] sm:$0x1]
    %v84 = vrot.slane %v69, 7
    %v85 = vsel %vm46, %v84, %v68
    %v86 = vrot.slane %v70, 6
    %v87 = vsel %vm49, %v86, %v85
    %v88 = vrot.slane %v71, 5
    %v89 = vsel %vm52, %v88, %v87
    %v90 = vrot.slane %v72, 4
    %v91 = vsel %vm55, %v90, %v89
    %v92 = vrot.slane %v73, 3
    %v93 = vsel %vm58, %v92, %v91
    %v94 = vrot.slane %v74, 2
    %v95 = vsel %vm61, %v94, %v93
    %v96 = vrot.slane %v75, 1
    %v97 = vsel %vm64, %v96, %v95
    %v99 = vadd.f32 %v67, %v97
    %v100 = vld [vmem:[#allocation3 + $0x2] sm:$0x1]
    %v101 = vld [vmem:[#allocation3 + $0xa] sm:$0x1]
    %v102 = vld [vmem:[#allocation3 + $0x12] sm:$0x1]
    %v103 = vld [vmem:[#allocation3 + $0x1a] sm:$0x1]
    %v104 = vld [vmem:[#allocation3 + $0x22] sm:$0x1]
    %v105 = vld [vmem:[#allocation3 + $0x2a] sm:$0x1]
    %v106 = vld [vmem:[#allocation3 + $0x32] sm:$0x1]
    %v107 = vld [vmem:[#allocation3 + $0x3a] sm:$0x1]
    %v116 = vrot.slane %v101, 7
    %v117 = vsel %vm46, %v116, %v100
    %v118 = vrot.slane %v102, 6
    %v119 = vsel %vm49, %v118, %v117
    %v120 = vrot.slane %v103, 5
    %v121 = vsel %vm52, %v120, %v119
    %v122 = vrot.slane %v104, 4
    %v123 = vsel %vm55, %v122, %v121
    %v124 = vrot.slane %v105, 3
    %v125 = vsel %vm58, %v124, %v123
    %v126 = vrot.slane %v106, 2
    %v127 = vsel %vm61, %v126, %v125
    %v128 = vrot.slane %v107, 1
    %v129 = vsel %vm64, %v128, %v127
    %v131 = vadd.f32 %v99, %v129
    %v132 = vld [vmem:[#allocation3 + $0x3] sm:$0x1]
    %v133 = vld [vmem:[#allocation3 + $0xb] sm:$0x1]
    %v134 = vld [vmem:[#allocation3 + $0x13] sm:$0x1]
    %v135 = vld [vmem:[#allocation3 + $0x1b] sm:$0x1]
    %v136 = vld [vmem:[#allocation3 + $0x23] sm:$0x1]
    %v137 = vld [vmem:[#allocation3 + $0x2b] sm:$0x1]
    %v138 = vld [vmem:[#allocation3 + $0x33] sm:$0x1]
    %v139 = vld [vmem:[#allocation3 + $0x3b] sm:$0x1]
    %v148 = vrot.slane %v133, 7
    %v149 = vsel %vm46, %v148, %v132
    %v150 = vrot.slane %v134, 6
    %v151 = vsel %vm49, %v150, %v149
    %v152 = vrot.slane %v135, 5
    %v153 = vsel %vm52, %v152, %v151
    %v154 = vrot.slane %v136, 4
    %v155 = vsel %vm55, %v154, %v153
    %v156 = vrot.slane %v137, 3
    %v157 = vsel %vm58, %v156, %v155
    %v158 = vrot.slane %v138, 2
    %v159 = vsel %vm61, %v158, %v157
    %v160 = vrot.slane %v139, 1
    %v161 = vsel %vm64, %v160, %v159
    %v163 = vadd.f32 %v131, %v161
    %v164 = vld [vmem:[#allocation3 + $0x4] sm:$0x1]
    %v165 = vld [vmem:[#allocation3 + $0xc] sm:$0x1]
    %v166 = vld [vmem:[#allocation3 + $0x14] sm:$0x1]
    %v167 = vld [vmem:[#allocation3 + $0x1c] sm:$0x1]
    %v168 = vld [vmem:[#allocation3 + $0x24] sm:$0x1]
    %v169 = vld [vmem:[#allocation3 + $0x2c] sm:$0x1]
    %v170 = vld [vmem:[#allocation3 + $0x34] sm:$0x1]
    %v171 = vld [vmem:[#allocation3 + $0x3c] sm:$0x1]
    %v180 = vrot.slane %v165, 7
    %v181 = vsel %vm46, %v180, %v164
    %v182 = vrot.slane %v166, 6
    %v183 = vsel %vm49, %v182, %v181
    %v184 = vrot.slane %v167, 5
    %v185 = vsel %vm52, %v184, %v183
    %v186 = vrot.slane %v168, 4
    %v187 = vsel %vm55, %v186, %v185
    %v188 = vrot.slane %v169, 3
    %v189 = vsel %vm58, %v188, %v187
    %v190 = vrot.slane %v170, 2
    %v191 = vsel %vm61, %v190, %v189
    %v192 = vrot.slane %v171, 1
    %v193 = vsel %vm64, %v192, %v191
    %v195 = vadd.f32 %v163, %v193
    %v196 = vld [vmem:[#allocation3 + $0x5] sm:$0x1]
    %v197 = vld [vmem:[#allocation3 + $0xd] sm:$0x1]
    %v198 = vld [vmem:[#allocation3 + $0x15] sm:$0x1]
    %v199 = vld [vmem:[#allocation3 + $0x1d] sm:$0x1]
    %v200 = vld [vmem:[#allocation3 + $0x25] sm:$0x1]
    %v201 = vld [vmem:[#allocation3 + $0x2d] sm:$0x1]
    %v202 = vld [vmem:[#allocation3 + $0x35] sm:$0x1]
    %v203 = vld [vmem:[#allocation3 + $0x3d] sm:$0x1]
    %v212 = vrot.slane %v197, 7
    %v213 = vsel %vm46, %v212, %v196
    %v214 = vrot.slane %v198, 6
    %v215 = vsel %vm49, %v214, %v213
    %v216 = vrot.slane %v199, 5
    %v217 = vsel %vm52, %v216, %v215
    %v218 = vrot.slane %v200, 4
    %v219 = vsel %vm55, %v218, %v217
    %v220 = vrot.slane %v201, 3
    %v221 = vsel %vm58, %v220, %v219
    %v222 = vrot.slane %v202, 2
    %v223 = vsel %vm61, %v222, %v221
    %v224 = vrot.slane %v203, 1
    %v225 = vsel %vm64, %v224, %v223
    %v227 = vadd.f32 %v195, %v225
    %v228 = vld [vmem:[#allocation3 + $0x6] sm:$0x1]
    %v229 = vld [vmem:[#allocation3 + $0xe] sm:$0x1]
    %v230 = vld [vmem:[#allocation3 + $0x16] sm:$0x1]
    %v231 = vld [vmem:[#allocation3 + $0x1e] sm:$0x1]
    %v232 = vld [vmem:[#allocation3 + $0x26] sm:$0x1]
    %v233 = vld [vmem:[#allocation3 + $0x2e] sm:$0x1]
    %v234 = vld [vmem:[#allocation3 + $0x36] sm:$0x1]
    %v235 = vld [vmem:[#allocation3 + $0x3e] sm:$0x1]
    %v244 = vrot.slane %v229, 7
    %v245 = vsel %vm46, %v244, %v228
    %v246 = vrot.slane %v230, 6
    %v247 = vsel %vm49, %v246, %v245
    %v248 = vrot.slane %v231, 5
    %v249 = vsel %vm52, %v248, %v247
    %v250 = vrot.slane %v232, 4
    %v251 = vsel %vm55, %v250, %v249
    %v252 = vrot.slane %v233, 3
    %v253 = vsel %vm58, %v252, %v251
    %v254 = vrot.slane %v234, 2
    %v255 = vsel %vm61, %v254, %v253
    %v256 = vrot.slane %v235, 1
    %v257 = vsel %vm64, %v256, %v255
    %v259 = vadd.f32 %v227, %v257
    %v260 = vld [vmem:[#allocation3 + $0x7] sm:$0x1]
    %v261 = vld [vmem:[#allocation3 + $0xf] sm:$0x1]
    %v262 = vld [vmem:[#allocation3 + $0x17] sm:$0x1]
    %v263 = vld [vmem:[#allocation3 + $0x1f] sm:$0x1]
    %v264 = vld [vmem:[#allocation3 + $0x27] sm:$0x1]
    %v265 = vld [vmem:[#allocation3 + $0x2f] sm:$0x1]
    %v266 = vld [vmem:[#allocation3 + $0x37] sm:$0x1]
    %v267 = vld [vmem:[#allocation3 + $0x3f] sm:$0x1]
    %v276 = vrot.slane %v261, 7
    %v277 = vsel %vm46, %v276, %v260
    %v278 = vrot.slane %v262, 6
    %v279 = vsel %vm49, %v278, %v277
    %v280 = vrot.slane %v263, 5
    %v281 = vsel %vm52, %v280, %v279
    %v282 = vrot.slane %v264, 4
    %v283 = vsel %vm55, %v282, %v281
    %v284 = vrot.slane %v265, 3
    %v285 = vsel %vm58, %v284, %v283
    %v286 = vrot.slane %v266, 2
    %v287 = vsel %vm61, %v286, %v285
    %v288 = vrot.slane %v267, 1
    %v289 = vsel %vm64, %v288, %v287
    %v291 = vadd.f32 %v259, %v289
    %292 = vst [vmem:[#allocation2] sm:$0xff] %v291
    // Predicated region
    $region14: #{tpu_custom_call.1} parent=1 // pred_check
      %p293 = pneg %p23
    $region15: #{tpu_custom_call.1} parent=1 // pred_check_branch
      %295 = sbr.rel (%p293) target = $region17
    $region16: #{tpu_custom_call.1} parent=1 // pred_region
      %v296 = vld [vmem:[#allocation2] sm:$0xff]
      %v297 = vmul.f32 %v296, 0.125
      %298 = vst [vmem:[#allocation6] sm:$0xff] %v297
    $region17: #{tpu_custom_call.1} parent=1 // pred_fallthru
      _
    // Predicated region
    $region18: #{tpu_custom_call.1} parent=1 // pred_check
      _
    $region19: #{tpu_custom_call.1} parent=1 // pred_check_branch
      %300 = sbr.rel (0) target = $region21
    $region20: #{tpu_custom_call.1} parent=1 // pred_region
      %s302 = ssub.s32 128, 128
      %303 = vsyncadd [#allocation5], %s302
      %s305 = sshll.u32 [#allocation6], 4
      %s306 = int_to_ptr.vmem [resolvable:$true] %s305
      %308 = dma.vmem_to_hbm [thread:$0]  %s306, 128, %s1, [#allocation5]
    $region21: #{tpu_custom_call.1} parent=1 // pred_fallthru
      _
    // Predicated region
    $region22: #{tpu_custom_call.1} parent=1 // pred_check
      _
    $region23: #{tpu_custom_call.1} parent=1 // pred_check_branch
      %310 = sbr.rel (0) target = $region25
    $region24: #{tpu_custom_call.1} parent=1 // pred_region
      %311 = dma.done [#allocation5], 128
    $region25: #{tpu_custom_call.1} parent=1 // pred_fallthru
      _
    %312 = vsyncpa [#allocation4], 1
    %313 = vsyncpa [#allocation5], 1

</llo_original>
